<compile_context>
chip_gen: v7x
topology: tpu7x:2x2x1
jax: 0.10.0
libtpu: 0.0.40
codegen_flags: <defaults>
</compile_context>

<pallas_src>
import jax
import jax.numpy as jnp
from jax.experimental import pallas as pl
from jax.experimental.pallas import tpu as pltpu

BN_EPS = 1e-5
LANE = 128
MAX_BATCH_TILE = 1024   # per-tile rows; amortizes ~0.35 us/step grid overhead


# ------------------------------ Pallas kernel ------------------------------ #

def _fused_model_kernel(x_ref, w_in_ref, sh_in_ref,
                        w1s_ref, sh1s_ref, w2s_ref, sh2s_ref,
                        w_out_ref, sh_out_ref, o_ref):
    """Entire LinearModel forward for one batch tile, activations VMEM-resident."""
    num_stage = w1s_ref.shape[0]

    # ---- input layer: relu(bn1(w1 x)); BN scale already folded into w_in.
    x = x_ref[...].astype(jnp.bfloat16)
    y = jnp.dot(x, w_in_ref[...], preferred_element_type=jnp.float32)
    y = jnp.maximum(y + sh_in_ref[...], 0.0)

    # ---- residual stages (static unroll; num_stage is a compile-time shape).
    for s in range(num_stage):
        h = jnp.dot(y.astype(jnp.bfloat16), w1s_ref[s],
                    preferred_element_type=jnp.float32)
        h = jnp.maximum(h + sh1s_ref[s], 0.0)
        h = jnp.dot(h.astype(jnp.bfloat16), w2s_ref[s],
                    preferred_element_type=jnp.float32)
        y = y + jnp.maximum(h + sh2s_ref[s], 0.0)

    # ---- final linear (no BN / relu); output is lane-padded to a 128-multiple.
    out = jnp.dot(y.astype(jnp.bfloat16), w_out_ref[...],
                  preferred_element_type=jnp.float32)
    o_ref[...] = (out + sh_out_ref[...]).astype(o_ref.dtype)


def linear_model_forward(params, x, *, max_batch_tile=MAX_BATCH_TILE):
    """Single fused pallas_call over the whole network; returns (B, output_size)."""
    w_in, sh_in = params["in"]
    w1s, sh1s, w2s, sh2s = params["stages"]
    w_out, sh_out = params["out"]

    B, d_in = x.shape
    H = w_in.shape[1]
    n_pad = w_out.shape[1]          # lane-padded output width (multiple of 128)
    S = w1s.shape[0]

    # cdiv-based batch tiling:
    #   * B <= max_batch_tile: one full-array tile (block dims == array dims,
    #     so no (8,128) divisibility requirement), grid=(1,).
    #   * B  > max_batch_tile: fixed tiles of max_batch_tile rows; pad the batch
    #     with zero rows up to a tile multiple. >=2 grid steps on a "parallel"
    #     axis shards work across both v7x TensorCores; bounded tile size keeps
    #     f32 intermediates well inside VMEM on every generation.
    if B <= max_batch_tile:
        bm = B
        b_pad = B
    else:
        bm = max_batch_tile
        b_pad = pl.cdiv(B, bm) * bm
    x_in = x if b_pad == B else jnp.pad(x, ((0, b_pad - B), (0, 0)))
    grid = (b_pad // bm,)

    x_spec = pl.BlockSpec((bm, d_in), lambda i: (i, 0))
    o_spec = pl.BlockSpec((bm, n_pad), lambda i: (i, 0))

    def whole(shape):  # full-array block, constant across the batch grid
        nd = len(shape)
        return pl.BlockSpec(shape, lambda i, _nd=nd: (0,) * _nd)

    in_specs = [
        x_spec,
        whole(w_in.shape), whole(sh_in.shape),
        whole(w1s.shape), whole(sh1s.shape),
        whole(w2s.shape), whole(sh2s.shape),
        whole(w_out.shape), whole(sh_out.shape),
    ]

    args = (x_in, w_in, sh_in, w1s, sh1s, w2s, sh2s, w_out, sh_out)
    flops = 2 * b_pad * (d_in * H + S * 2 * H * H + H * n_pad)
    bytes_accessed = (sum(int(a.size) * a.dtype.itemsize for a in args)
                      + b_pad * n_pad * 4)

    out_padded = pl.pallas_call(
        _fused_model_kernel,
        out_shape=jax.ShapeDtypeStruct((b_pad, n_pad), jnp.float32),
        grid_spec=pl.GridSpec(grid=grid, in_specs=in_specs, out_specs=o_spec),
        compiler_params=pltpu.CompilerParams(
            dimension_semantics=("parallel",)),
        cost_estimate=pl.CostEstimate(
            flops=flops, transcendentals=0, bytes_accessed=bytes_accessed),
    )(*args)

    return out_padded[:B, :params["output_size"]]


# --------------------------- parameter construction ------------------------ #

def _linear_params(key, d_in, d_out):
    kw, kb = jax.random.split(key)
    w = jax.random.normal(kw, (d_in, d_out), jnp.float32) * 0.05
    b = jax.random.normal(kb, (d_out,), jnp.float32) * 0.05
    return w, b


def _bn_params(key, d):
    kg, kb, km, kv = jax.random.split(key, 4)
    gamma = 1.0 + 0.1 * jax.random.normal(kg, (d,), jnp.float32)
    beta = 0.1 * jax.random.normal(kb, (d,), jnp.float32)
    mean = 0.1 * jax.random.normal(km, (d,), jnp.float32)
    var = jnp.abs(jax.random.normal(kv, (d,), jnp.float32)) + 0.5
    return gamma, beta, mean, var


def _fold_bn_into_weights(w, b, gamma, beta, mean, var):
    """(xW + b - mean)/sqrt(var+eps)*gamma + beta  ->  x(W*scale) + shift."""
    scale = gamma / jnp.sqrt(var + BN_EPS)
    w_folded = w * scale[None, :]
    shift = (b - mean) * scale + beta
    return w_folded, shift


def init_linear_model(key, linear_size, num_stage, input_size, output_size):
    keys = jax.random.split(key, 2 + 4 * num_stage + 1)
    params = {"output_size": output_size}

    # --- w1 + bn1 (BN scale folded, weight stored bf16, shift f32)
    w, b = _linear_params(keys[0], input_size, linear_size)
    g, be, m, v = _bn_params(keys[1], linear_size)
    w_in, sh_in = _fold_bn_into_weights(w, b, g, be, m, v)
    params["in"] = (w_in.astype(jnp.bfloat16),
                    sh_in.reshape(1, linear_size).astype(jnp.float32))

    # --- stages, stacked along a leading axis for a single kernel argument each
    w1s, sh1s, w2s, sh2s = [], [], [], []
    for s in range(num_stage):
        k0, k1, k2, k3 = keys[2 + 4 * s: 2 + 4 * (s + 1)]
        w1, b1 = _linear_params(k0, linear_size, linear_size)
        w1f, sh1 = _fold_bn_into_weights(w1, b1, *_bn_params(k1, linear_size))
        w2, b2 = _linear_params(k2, linear_size, linear_size)
        w2f, sh2 = _fold_bn_into_weights(w2, b2, *_bn_params(k3, linear_size))
        w1s.append(w1f); sh1s.append(sh1)
        w2s.append(w2f); sh2s.append(sh2)
    params["stages"] = (
        jnp.stack(w1s).astype(jnp.bfloat16),
        jnp.stack(sh1s).reshape(num_stage, 1, linear_size).astype(jnp.float32),
        jnp.stack(w2s).astype(jnp.bfloat16),
        jnp.stack(sh2s).reshape(num_stage, 1, linear_size).astype(jnp.float32),
    )

    # --- final w2 (no BN / relu); lane-pad the output width to a 128 multiple
    w, b = _linear_params(keys[-1], linear_size, output_size)
    n_pad = max(LANE, ((output_size + LANE - 1) // LANE) * LANE)
    w_pad = jnp.zeros((linear_size, n_pad), jnp.float32).at[:, :output_size].set(w)
    b_pad = jnp.zeros((n_pad,), jnp.float32).at[:output_size].set(b)
    params["out"] = (w_pad.astype(jnp.bfloat16),
                     b_pad.reshape(1, n_pad).astype(jnp.float32))
    return params


# ------------------------------- JAX reference ------------------------------ #

def linear_model_reference(params, x):
    """Pure-JAX reference; mimics the kernel's bf16 rounding of matmul inputs
    (f32 accumulation), so it tracks the kernel numerics closely."""
    w_in, sh_in = params["in"]
    w1s, sh1s, w2s, sh2s = params["stages"]
    w_out, sh_out = params["out"]
    f32 = lambda a: a.astype(jnp.float32)
    r16 = lambda a: a.astype(jnp.bfloat16).astype(jnp.float32)   # bf16 round-trip

    y = jnp.maximum(r16(x) @ f32(w_in) + sh_in, 0.0)
    for s in range(w1s.shape[0]):
        h = jnp.maximum(r16(y) @ f32(w1s[s]) + sh1s[s], 0.0)
        y = y + jnp.maximum(r16(h) @ f32(w2s[s]) + sh2s[s], 0.0)
    out = r16(y) @ f32(w_out) + sh_out
    return out[:, :params["output_size"]]


# ----------------------------------- main ----------------------------------- #

if __name__ == "__main__":
    # Small, forward-consistent shapes: input = 16*2 keypoint coords,
    # output = 16*3 lifted coords, hidden = 256, 2 stages.
    input_size = 16 * 2
    output_size = 16 * 3
    linear_size = 256
    num_stage = 2

    key = jax.random.PRNGKey(0)
    kp, kx1, kx2 = jax.random.split(key, 3)
    params = init_linear_model(kp, linear_size, num_stage, input_size, output_size)

    # --- main small-batch run (single full-array tile, grid=(1,)).
    batch = 8
    x = jax.random.normal(kx1, (batch, input_size), jnp.float32)
    out = jax.block_until_ready(linear_model_forward(params, x))
    ref = linear_model_reference(params, x)
    assert out.shape == (batch, output_size)
    assert jnp.allclose(out, ref, atol=2e-2, rtol=2e-2), "mismatch vs reference (B=8)"

    # --- exercise the cdiv tiling + padded-batch path with a small tile override
    #     (non-multiple batch -> zero-padded to 3 tiles, 'parallel' batch axis).
    batch2 = 200
    x2 = jax.random.normal(kx2, (batch2, input_size), jnp.float32)
    out2 = jax.block_until_ready(
        linear_model_forward(params, x2, max_batch_tile=72))
    ref2 = linear_model_reference(params, x2)
    assert out2.shape == (batch2, output_size)
    assert jnp.allclose(out2, ref2, atol=2e-2, rtol=2e-2), "mismatch vs reference (tiled)"

    print("KERNEL_OK")
</pallas_src>

<mosaic_0001>
module attributes {stable_mosaic.version = 11 : i64} {
  func.func @_fused_model_kernel(%arg0: i32, %arg1: memref<8x32xf32, #tpu.memory_space<vmem>>, %arg2: memref<32x256xbf16, #tpu.memory_space<vmem>>, %arg3: memref<1x256xf32, #tpu.memory_space<vmem>>, %arg4: memref<2x256x256xbf16, #tpu.memory_space<vmem>>, %arg5: memref<2x1x256xf32, #tpu.memory_space<vmem>>, %arg6: memref<2x256x256xbf16, #tpu.memory_space<vmem>>, %arg7: memref<2x1x256xf32, #tpu.memory_space<vmem>>, %arg8: memref<256x128xbf16, #tpu.memory_space<vmem>>, %arg9: memref<1x128xf32, #tpu.memory_space<vmem>>, %arg10: memref<8x128xf32, #tpu.memory_space<vmem>>) attributes {dimension_semantics = [#tpu.dimension_semantics<parallel>], iteration_bounds = array<i64: 1>, scalar_prefetch = 0 : i64, scratch_operands = 0 : i64, tpu.core_type = #tpu.core_type<tc>, window_params = [{transform_indices = @transform_0, window_bounds = array<i64: 8, 32>}, {pipeline_mode = #tpu.pipeline_mode<synchronous>, transform_indices = @transform_1, window_bounds = array<i64: 32, 256>}, {pipeline_mode = #tpu.pipeline_mode<synchronous>, transform_indices = @transform_2, window_bounds = array<i64: 1, 256>}, {pipeline_mode = #tpu.pipeline_mode<synchronous>, transform_indices = @transform_3, window_bounds = array<i64: 2, 256, 256>}, {pipeline_mode = #tpu.pipeline_mode<synchronous>, transform_indices = @transform_4, window_bounds = array<i64: 2, 1, 256>}, {pipeline_mode = #tpu.pipeline_mode<synchronous>, transform_indices = @transform_5, window_bounds = array<i64: 2, 256, 256>}, {pipeline_mode = #tpu.pipeline_mode<synchronous>, transform_indices = @transform_6, window_bounds = array<i64: 2, 1, 256>}, {pipeline_mode = #tpu.pipeline_mode<synchronous>, transform_indices = @transform_7, window_bounds = array<i64: 256, 128>}, {pipeline_mode = #tpu.pipeline_mode<synchronous>, transform_indices = @transform_8, window_bounds = array<i64: 1, 128>}, {transform_indices = @transform_9, window_bounds = array<i64: 8, 128>}]} {
    %c0 = arith.constant 0 : index
    %c0_0 = arith.constant 0 : index
    %0 = vector.load %arg1[%c0, %c0_0] : memref<8x32xf32, #tpu.memory_space<vmem>>, vector<8x32xf32>
    %1 = arith.truncf %0 : vector<8x32xf32> to vector<8x32xbf16>
    %c0_1 = arith.constant 0 : index
    %c0_2 = arith.constant 0 : index
    %2 = vector.load %arg2[%c0_1, %c0_2] : memref<32x256xbf16, #tpu.memory_space<vmem>>, vector<32x256xbf16>
    %cst = arith.constant dense<0.000000e+00> : vector<8x256xf32>
    %3 = tpu.matmul %1, %2, %cst {dimension_numbers = #tpu.dot_dimension_numbers<[1], [0], [0], [1], [0, 0, 1, 1], [], []>} : vector<8x32xbf16>, vector<32x256xbf16>, vector<8x256xf32> -> vector<8x256xf32>
    %c0_3 = arith.constant 0 : index
    %c0_4 = arith.constant 0 : index
    %4 = vector.load %arg3[%c0_3, %c0_4] : memref<1x256xf32, #tpu.memory_space<vmem>>, vector<1x256xf32>
    %5 = vector.broadcast %4 : vector<1x256xf32> to vector<8x256xf32>
    %6 = arith.addf %3, %5 : vector<8x256xf32>
    %cst_5 = arith.constant 0.000000e+00 : f32
    %7 = vector.broadcast %cst_5 : f32 to vector<8x256xf32>
    %8 = arith.maximumf %6, %7 : vector<8x256xf32>
    %9 = arith.truncf %8 : vector<8x256xf32> to vector<8x256xbf16>
    %c0_6 = arith.constant 0 : index
    %c0_7 = arith.constant 0 : index
    %c0_8 = arith.constant 0 : index
    %10 = vector.load %arg4[%c0_6, %c0_7, %c0_8] : memref<2x256x256xbf16, #tpu.memory_space<vmem>>, vector<1x256x256xbf16>
    %11 = vector.shape_cast %10 : vector<1x256x256xbf16> to vector<256x256xbf16>
    %cst_9 = arith.constant dense<0.000000e+00> : vector<8x256xf32>
    %12 = tpu.matmul %9, %11, %cst_9 {dimension_numbers = #tpu.dot_dimension_numbers<[1], [0], [0], [1], [0, 0, 1, 1], [], []>} : vector<8x256xbf16>, vector<256x256xbf16>, vector<8x256xf32> -> vector<8x256xf32>
    %c0_10 = arith.constant 0 : index
    %c0_11 = arith.constant 0 : index
    %c0_12 = arith.constant 0 : index
    %13 = vector.load %arg5[%c0_10, %c0_11, %c0_12] : memref<2x1x256xf32, #tpu.memory_space<vmem>>, vector<1x1x256xf32>
    %14 = vector.shape_cast %13 : vector<1x1x256xf32> to vector<1x256xf32>
    %15 = vector.broadcast %14 : vector<1x256xf32> to vector<8x256xf32>
    %16 = arith.addf %12, %15 : vector<8x256xf32>
    %cst_13 = arith.constant 0.000000e+00 : f32
    %17 = vector.broadcast %cst_13 : f32 to vector<8x256xf32>
    %18 = arith.maximumf %16, %17 : vector<8x256xf32>
    %19 = arith.truncf %18 : vector<8x256xf32> to vector<8x256xbf16>
    %c0_14 = arith.constant 0 : index
    %c0_15 = arith.constant 0 : index
    %c0_16 = arith.constant 0 : index
    %20 = vector.load %arg6[%c0_14, %c0_15, %c0_16] : memref<2x256x256xbf16, #tpu.memory_space<vmem>>, vector<1x256x256xbf16>
    %21 = vector.shape_cast %20 : vector<1x256x256xbf16> to vector<256x256xbf16>
    %cst_17 = arith.constant dense<0.000000e+00> : vector<8x256xf32>
    %22 = tpu.matmul %19, %21, %cst_17 {dimension_numbers = #tpu.dot_dimension_numbers<[1], [0], [0], [1], [0, 0, 1, 1], [], []>} : vector<8x256xbf16>, vector<256x256xbf16>, vector<8x256xf32> -> vector<8x256xf32>
    %c0_18 = arith.constant 0 : index
    %c0_19 = arith.constant 0 : index
    %c0_20 = arith.constant 0 : index
    %23 = vector.load %arg7[%c0_18, %c0_19, %c0_20] : memref<2x1x256xf32, #tpu.memory_space<vmem>>, vector<1x1x256xf32>
    %24 = vector.shape_cast %23 : vector<1x1x256xf32> to vector<1x256xf32>
    %25 = vector.broadcast %24 : vector<1x256xf32> to vector<8x256xf32>
    %26 = arith.addf %22, %25 : vector<8x256xf32>
    %cst_21 = arith.constant 0.000000e+00 : f32
    %27 = vector.broadcast %cst_21 : f32 to vector<8x256xf32>
    %28 = arith.maximumf %26, %27 : vector<8x256xf32>
    %29 = arith.addf %8, %28 : vector<8x256xf32>
    %30 = arith.truncf %29 : vector<8x256xf32> to vector<8x256xbf16>
    %c1 = arith.constant 1 : index
    %c0_22 = arith.constant 0 : index
    %c0_23 = arith.constant 0 : index
    %31 = vector.load %arg4[%c1, %c0_22, %c0_23] : memref<2x256x256xbf16, #tpu.memory_space<vmem>>, vector<1x256x256xbf16>
    %32 = vector.shape_cast %31 : vector<1x256x256xbf16> to vector<256x256xbf16>
    %cst_24 = arith.constant dense<0.000000e+00> : vector<8x256xf32>
    %33 = tpu.matmul %30, %32, %cst_24 {dimension_numbers = #tpu.dot_dimension_numbers<[1], [0], [0], [1], [0, 0, 1, 1], [], []>} : vector<8x256xbf16>, vector<256x256xbf16>, vector<8x256xf32> -> vector<8x256xf32>
    %c1_25 = arith.constant 1 : index
    %c0_26 = arith.constant 0 : index
    %c0_27 = arith.constant 0 : index
    %34 = vector.load %arg5[%c1_25, %c0_26, %c0_27] : memref<2x1x256xf32, #tpu.memory_space<vmem>>, vector<1x1x256xf32>
    %35 = vector.shape_cast %34 : vector<1x1x256xf32> to vector<1x256xf32>
    %36 = vector.broadcast %35 : vector<1x256xf32> to vector<8x256xf32>
    %37 = arith.addf %33, %36 : vector<8x256xf32>
    %cst_28 = arith.constant 0.000000e+00 : f32
    %38 = vector.broadcast %cst_28 : f32 to vector<8x256xf32>
    %39 = arith.maximumf %37, %38 : vector<8x256xf32>
    %40 = arith.truncf %39 : vector<8x256xf32> to vector<8x256xbf16>
    %c1_29 = arith.constant 1 : index
    %c0_30 = arith.constant 0 : index
    %c0_31 = arith.constant 0 : index
    %41 = vector.load %arg6[%c1_29, %c0_30, %c0_31] : memref<2x256x256xbf16, #tpu.memory_space<vmem>>, vector<1x256x256xbf16>
    %42 = vector.shape_cast %41 : vector<1x256x256xbf16> to vector<256x256xbf16>
    %cst_32 = arith.constant dense<0.000000e+00> : vector<8x256xf32>
    %43 = tpu.matmul %40, %42, %cst_32 {dimension_numbers = #tpu.dot_dimension_numbers<[1], [0], [0], [1], [0, 0, 1, 1], [], []>} : vector<8x256xbf16>, vector<256x256xbf16>, vector<8x256xf32> -> vector<8x256xf32>
    %c1_33 = arith.constant 1 : index
    %c0_34 = arith.constant 0 : index
    %c0_35 = arith.constant 0 : index
    %44 = vector.load %arg7[%c1_33, %c0_34, %c0_35] : memref<2x1x256xf32, #tpu.memory_space<vmem>>, vector<1x1x256xf32>
    %45 = vector.shape_cast %44 : vector<1x1x256xf32> to vector<1x256xf32>
    %46 = vector.broadcast %45 : vector<1x256xf32> to vector<8x256xf32>
    %47 = arith.addf %43, %46 : vector<8x256xf32>
    %cst_36 = arith.constant 0.000000e+00 : f32
    %48 = vector.broadcast %cst_36 : f32 to vector<8x256xf32>
    %49 = arith.maximumf %47, %48 : vector<8x256xf32>
    %50 = arith.addf %29, %49 : vector<8x256xf32>
    %51 = arith.truncf %50 : vector<8x256xf32> to vector<8x256xbf16>
    %c0_37 = arith.constant 0 : index
    %c0_38 = arith.constant 0 : index
    %52 = vector.load %arg8[%c0_37, %c0_38] : memref<256x128xbf16, #tpu.memory_space<vmem>>, vector<256x128xbf16>
    %cst_39 = arith.constant dense<0.000000e+00> : vector<8x128xf32>
    %53 = tpu.matmul %51, %52, %cst_39 {dimension_numbers = #tpu.dot_dimension_numbers<[1], [0], [0], [1], [0, 0, 1, 1], [], []>} : vector<8x256xbf16>, vector<256x128xbf16>, vector<8x128xf32> -> vector<8x128xf32>
    %c0_40 = arith.constant 0 : index
    %c0_41 = arith.constant 0 : index
    %54 = vector.load %arg9[%c0_40, %c0_41] : memref<1x128xf32, #tpu.memory_space<vmem>>, vector<1x128xf32>
    %55 = vector.broadcast %54 : vector<1x128xf32> to vector<8x128xf32>
    %56 = arith.addf %53, %55 : vector<8x128xf32>
    %c0_42 = arith.constant 0 : index
    %c0_43 = arith.constant 0 : index
    %57 = vector.load %arg10[%c0_42, %c0_43] : memref<8x128xf32, #tpu.memory_space<vmem>>, vector<8x128xf32>
    tpu.vector_store %arg10[%c0_42, %c0_43], %56 {strides = array<i32>} : memref<8x128xf32, #tpu.memory_space<vmem>>, vector<8x128xf32>,
    return
  }
  func.func @transform_0(%arg0: i32) -> (i32, i32) {
    %c0_i32 = arith.constant 0 : i32
    %c0_i32_0 = arith.constant 0 : i32
    return %arg0, %c0_i32 : i32, i32
  }
  func.func @transform_1(%arg0: i32) -> (i32, i32) {
    %c0_i32 = arith.constant 0 : i32
    %c0_i32_0 = arith.constant 0 : i32
    %c0_i32_1 = arith.constant 0 : i32
    return %c0_i32, %c0_i32_0 : i32, i32
  }
  func.func @transform_2(%arg0: i32) -> (i32, i32) {
    %c0_i32 = arith.constant 0 : i32
    %c0_i32_0 = arith.constant 0 : i32
    %c0_i32_1 = arith.constant 0 : i32
    return %c0_i32, %c0_i32_0 : i32, i32
  }
  func.func @transform_3(%arg0: i32) -> (i32, i32, i32) {
    %c0_i32 = arith.constant 0 : i32
    %c0_i32_0 = arith.constant 0 : i32
    %c0_i32_1 = arith.constant 0 : i32
    %c0_i32_2 = arith.constant 0 : i32
    return %c0_i32, %c0_i32_0, %c0_i32_1 : i32, i32, i32
  }
  func.func @transform_4(%arg0: i32) -> (i32, i32, i32) {
    %c0_i32 = arith.constant 0 : i32
    %c0_i32_0 = arith.constant 0 : i32
    %c0_i32_1 = arith.constant 0 : i32
    %c0_i32_2 = arith.constant 0 : i32
    return %c0_i32, %c0_i32_0, %c0_i32_1 : i32, i32, i32
  }
  func.func @transform_5(%arg0: i32) -> (i32, i32, i32) {
    %c0_i32 = arith.constant 0 : i32
    %c0_i32_0 = arith.constant 0 : i32
    %c0_i32_1 = arith.constant 0 : i32
    %c0_i32_2 = arith.constant 0 : i32
    return %c0_i32, %c0_i32_0, %c0_i32_1 : i32, i32, i32
  }
  func.func @transform_6(%arg0: i32) -> (i32, i32, i32) {
    %c0_i32 = arith.constant 0 : i32
    %c0_i32_0 = arith.constant 0 : i32
    %c0_i32_1 = arith.constant 0 : i32
    %c0_i32_2 = arith.constant 0 : i32
    return %c0_i32, %c0_i32_0, %c0_i32_1 : i32, i32, i32
  }
  func.func @transform_7(%arg0: i32) -> (i32, i32) {
    %c0_i32 = arith.constant 0 : i32
    %c0_i32_0 = arith.constant 0 : i32
    %c0_i32_1 = arith.constant 0 : i32
    return %c0_i32, %c0_i32_0 : i32, i32
  }
  func.func @transform_8(%arg0: i32) -> (i32, i32) {
    %c0_i32 = arith.constant 0 : i32
    %c0_i32_0 = arith.constant 0 : i32
    %c0_i32_1 = arith.constant 0 : i32
    return %c0_i32, %c0_i32_0 : i32, i32
  }
  func.func @transform_9(%arg0: i32) -> (i32, i32) {
    %c0_i32 = arith.constant 0 : i32
    %c0_i32_0 = arith.constant 0 : i32
    return %arg0, %c0_i32 : i32, i32
  }
}

</mosaic_0001>

<llo_original>
// kernel: tpu_custom_call.1
$region0: #{tpu_custom_call.1}
  #allocation0 [shape = 'u32[]', space=smem, size = 0x4, offset = 0x4, fixed_abs, tag = 'smem constant byte address 0x4 - core index']
  #allocation1 [shape = 'u32[144,128]{1,0:T(1,128)}', space=vmem, size = 0x12000, scoped, tag = 'internal scratch']
  %s0 = inlined_call_operand.hbm [shape: f32[8,32], index: 0, kind: input, shape index: {}]
  %s1 = inlined_call_operand.hbm [shape: bf16[32,256], index: 1, kind: input, shape index: {}]
  %s2 = inlined_call_operand.vmem [shape: f32[1,256], index: 2, kind: input, shape index: {}]
  %s3 = inlined_call_operand.hbm [shape: bf16[2,256,256], index: 3, kind: input, shape index: {}]
  %s4 = inlined_call_operand.vmem [shape: f32[2,1,256], index: 4, kind: input, shape index: {}]
  %s5 = inlined_call_operand.hbm [shape: bf16[2,256,256], index: 5, kind: input, shape index: {}]
  %s6 = inlined_call_operand.vmem [shape: f32[2,1,256], index: 6, kind: input, shape index: {}]
  %s7 = inlined_call_operand.hbm [shape: bf16[256,128], index: 7, kind: input, shape index: {}]
  %s8 = inlined_call_operand.vmem [shape: f32[1,128], index: 8, kind: input, shape index: {}]
  %s9 = inlined_call_operand.hbm [shape: f32[8,128], index: 9, kind: output, shape index: {}]
  %s10 = sld [smem:[#allocation0]]
  $region66: #{tpu_custom_call.1} parent=0
    _
  %s12 = ssub.s32 1, %s10
  %s13 = scalar_select 0, %s12, %s10
  $region1: #{tpu_custom_call.1} parent=0
    #allocation2 [shape = 'u8[4096]{0}', space=vmem, size = 0x1000, scoped, tag = 'input window, operand 0, single buffered']
    #allocation3 [shape = 's32[1]{0}', space=sflag, size = 0x4, scoped, tag = 'scoped memory for tpu_custom_call.1']
    #allocation4 [shape = 's32[1]{0}', space=sflag, size = 0x4, scoped, tag = 'scoped memory for tpu_custom_call.1']
    #allocation5 [shape = 'u8[16384]{0}', space=vmem, size = 0x4000, scoped, tag = 'input window, operand 1, single buffered']
    #allocation6 [shape = 's32[1]{0}', space=sflag, size = 0x4, scoped, tag = 'scoped memory for tpu_custom_call.1']
    #allocation7 [shape = 'u8[262144]{0}', space=vmem, size = 0x40000, scoped, tag = 'input window, operand 3, single buffered']
    #allocation8 [shape = 'u8[262144]{0}', space=vmem, size = 0x40000, scoped, tag = 'input window, operand 5, single buffered']
    #allocation9 [shape = 's32[1]{0}', space=sflag, size = 0x4, scoped, tag = 'scoped memory for tpu_custom_call.1']
    #allocation10 [shape = 'u8[65536]{0}', space=vmem, size = 0x10000, scoped, tag = 'input window, operand 7, single buffered']
    #allocation11 [shape = 'u8[4096]{0}', space=vmem, size = 0x1000, scoped, tag = 'output window, operand 0, single buffered']
    %14 = vsyncpa [#allocation3], 0
    %15 = vsyncpa [#allocation6], 0
    %16 = vsyncpa [#allocation9], 0
    %17 = vsyncpa [#allocation4], 0
    // Predicated region
    $region2: #{tpu_custom_call.1} parent=1 // pred_check
      _
    $region3: #{tpu_custom_call.1} parent=1 // pred_check_branch
      %19 = sbr.rel (0) target = $region5
    $region4: #{tpu_custom_call.1} parent=1 // pred_region
      %s21 = ssub.s32 128, 128
      %22 = vsyncadd [#allocation3], %s21
      %s24 = sshll.u32 [#allocation2], 4
      %s25 = int_to_ptr.vmem [resolvable:$true] %s24
      %27 = dma.hbm_to_vmem [thread:$0]  %s0, 128, %s25, [#allocation3]
    $region5: #{tpu_custom_call.1} parent=1 // pred_fallthru
      _
    // Predicated region
    $region6: #{tpu_custom_call.1} parent=1 // pred_check
      _
    $region7: #{tpu_custom_call.1} parent=1 // pred_check_branch
      %29 = sbr.rel (0) target = $region9
    $region8: #{tpu_custom_call.1} parent=1 // pred_region
      %s31 = ssub.s32 512, 512
      %32 = vsyncadd [#allocation6], %s31
      %s33 = sshll.u32 [#allocation5], 4
      %s34 = int_to_ptr.vmem [resolvable:$true] %s33
      %39 = dma.hbm_to_vmem [thread:$0]  %s1, 512, %s34, [#allocation6], 128, 128, 8
    $region9: #{tpu_custom_call.1} parent=1 // pred_fallthru
      _
    // Predicated region
    $region10: #{tpu_custom_call.1} parent=1 // pred_check
      _
    $region11: #{tpu_custom_call.1} parent=1 // pred_check_branch
      %41 = sbr.rel (0) target = $region13
    $region12: #{tpu_custom_call.1} parent=1 // pred_region
      _
    $region13: #{tpu_custom_call.1} parent=1 // pred_fallthru
      _
    // Predicated region
    $region14: #{tpu_custom_call.1} parent=1 // pred_check
      _
    $region15: #{tpu_custom_call.1} parent=1 // pred_check_branch
      %43 = sbr.rel (0) target = $region17
    $region16: #{tpu_custom_call.1} parent=1 // pred_region
      %s45 = ssub.s32 8192, 8192
      %46 = vsyncadd [#allocation6], %s45
      %s47 = sshll.u32 [#allocation7], 4
      %s48 = int_to_ptr.vmem [resolvable:$true] %s47
      %53 = dma.hbm_to_vmem [thread:$0]  %s3, 8192, %s48, [#allocation6], 128, 128, 8
    $region17: #{tpu_custom_call.1} parent=1 // pred_fallthru
      _
    // Predicated region
    $region18: #{tpu_custom_call.1} parent=1 // pred_check
      _
    $region19: #{tpu_custom_call.1} parent=1 // pred_check_branch
      %55 = sbr.rel (0) target = $region21
    $region20: #{tpu_custom_call.1} parent=1 // pred_region
      _
    $region21: #{tpu_custom_call.1} parent=1 // pred_fallthru
      _
    // Predicated region
    $region22: #{tpu_custom_call.1} parent=1 // pred_check
      _
    $region23: #{tpu_custom_call.1} parent=1 // pred_check_branch
      %57 = sbr.rel (0) target = $region25
    $region24: #{tpu_custom_call.1} parent=1 // pred_region
      %s59 = ssub.s32 8192, 8192
      %60 = vsyncadd [#allocation9], %s59
      %s61 = sshll.u32 [#allocation8], 4
      %s62 = int_to_ptr.vmem [resolvable:$true] %s61
      %67 = dma.hbm_to_vmem [thread:$0]  %s5, 8192, %s62, [#allocation9], 128, 128, 8
    $region25: #{tpu_custom_call.1} parent=1 // pred_fallthru
      _
    // Predicated region
    $region26: #{tpu_custom_call.1} parent=1 // pred_check
      _
    $region27: #{tpu_custom_call.1} parent=1 // pred_check_branch
      %69 = sbr.rel (0) target = $region29
    $region28: #{tpu_custom_call.1} parent=1 // pred_region
      _
    $region29: #{tpu_custom_call.1} parent=1 // pred_fallthru
      _
    // Predicated region
    $region30: #{tpu_custom_call.1} parent=1 // pred_check
      _
    $region31: #{tpu_custom_call.1} parent=1 // pred_check_branch
      %71 = sbr.rel (0) target = $region33
    $region32: #{tpu_custom_call.1} parent=1 // pred_region
      %s73 = ssub.s32 2048, 2048
      %74 = vsyncadd [#allocation9], %s73
      %s75 = sshll.u32 [#allocation10], 4
      %s76 = int_to_ptr.vmem [resolvable:$true] %s75
      %81 = dma.hbm_to_vmem [thread:$0]  %s7, 2048, %s76, [#allocation9], 64, 64, 4
    $region33: #{tpu_custom_call.1} parent=1 // pred_fallthru
      _
    // Predicated region
    $region34: #{tpu_custom_call.1} parent=1 // pred_check
      _
    $region35: #{tpu_custom_call.1} parent=1 // pred_check_branch
      %83 = sbr.rel (0) target = $region37
    $region36: #{tpu_custom_call.1} parent=1 // pred_region
      _
    $region37: #{tpu_custom_call.1} parent=1 // pred_fallthru
      _
    // Predicated region
    $region38: #{tpu_custom_call.1} parent=1 // pred_check
      _
    $region39: #{tpu_custom_call.1} parent=1 // pred_check_branch
      %85 = sbr.rel (0) target = $region41
    $region40: #{tpu_custom_call.1} parent=1 // pred_region
      %86 = dma.done [#allocation3], 128
    $region41: #{tpu_custom_call.1} parent=1 // pred_fallthru
      _
    // Predicated region
    $region42: #{tpu_custom_call.1} parent=1 // pred_check
      _
    $region43: #{tpu_custom_call.1} parent=1 // pred_check_branch
      %88 = sbr.rel (0) target = $region45
    $region44: #{tpu_custom_call.1} parent=1 // pred_region
      %89 = dma.done [#allocation6], 512
    $region45: #{tpu_custom_call.1} parent=1 // pred_fallthru
      _
    // Predicated region
    $region46: #{tpu_custom_call.1} parent=1 // pred_check
      _
    $region47: #{tpu_custom_call.1} parent=1 // pred_check_branch
      %91 = sbr.rel (0) target = $region49
    $region48: #{tpu_custom_call.1} parent=1 // pred_region
      %92 = dma.done [#allocation6], 8192
    $region49: #{tpu_custom_call.1} parent=1 // pred_fallthru
      _
    // Predicated region
    $region50: #{tpu_custom_call.1} parent=1 // pred_check
      _
    $region51: #{tpu_custom_call.1} parent=1 // pred_check_branch
      %94 = sbr.rel (0) target = $region53
    $region52: #{tpu_custom_call.1} parent=1 // pred_region
      %95 = dma.done [#allocation9], 8192
    $region53: #{tpu_custom_call.1} parent=1 // pred_fallthru
      _
    // Predicated region
    $region54: #{tpu_custom_call.1} parent=1 // pred_check
      _
    $region55: #{tpu_custom_call.1} parent=1 // pred_check_branch
      %97 = sbr.rel (0) target = $region57
    $region56: #{tpu_custom_call.1} parent=1 // pred_region
      %98 = dma.done [#allocation9], 2048
    $region57: #{tpu_custom_call.1} parent=1 // pred_fallthru
      _
    %v100 = vld [vmem:[#allocation2] sm:$0xff]
    %v101 = vpack.c.bf16 %v100, %v100
    %v102 = vld [vmem:[#allocation5] sm:$0xff]
    %v103 = vld [vmem:[#allocation5 + $0x8] sm:$0xff]
    %v104 = vld [vmem:[#allocation5 + $0x10] sm:$0xff]
    %v105 = vld [vmem:[#allocation5 + $0x18] sm:$0xff]
    %v106 = vld [vmem:[%s2] sm:$0x3]
    %v108 = vlaneseq
    %v109 = vshrl.u32 %v108, 7
    %v110 = vsub.s32 0, %v109
    %v111 = vrot.slane %v106, %v110
    %v112 = vlaneseq
    %v113 = vshrl.u32 %v112, 7
    %v114 = vsub.s32 1, %v113
    %v115 = vrot.slane %v106, %v114
    %v122 = vunpack.c.l.b16 %v102
    %v123 = vunpack.c.h.b16 %v102
    %v124 = vunpack.c.l.b16 %v103
    %v125 = vunpack.c.h.b16 %v103
    %v126 = vunpack.c.l.b16 %v104
    %v127 = vunpack.c.h.b16 %v104
    %v128 = vunpack.c.l.b16 %v105
    %v129 = vunpack.c.h.b16 %v105
    %v130 = vpack.c.b16 %v124, %v122
    %v131 = vpack.c.b16 %v125, %v123
    %v132 = vpack.c.b16 %v128, %v126
    %v133 = vpack.c.b16 %v129, %v127
    %vm138 = vcmask 261120
    %v140 = vsel %vm138, %v101, 0
    %142 = vmatprep.subr.bf16.mxu0 %v131
    %143 = vmatpush1.bf16.msra.mxu0 %v130
    %144 = vmatprep.subr.bf16.mxu0 %v133
    %145 = vmatpush1.bf16.msra.mxu0 %v132
    %146 = vmatprep.subr.bf16.mxu0 0
    %147 = vmatpush1.bf16.msra.mxu0 0
    %148 = vmatprep.subr.bf16.mxu0 0
    %149 = vmatpush1.bf16.msra.mxu0 0
    %150 = vmatprep.subr.bf16.mxu0 0
    %151 = vmatpush1.bf16.msra.mxu0 0
    %152 = vmatprep.subr.bf16.mxu0 0
    %153 = vmatpush1.bf16.msra.mxu0 0
    %154 = vmatprep.subr.bf16.mxu0 0
    %155 = vmatpush1.bf16.msra.mxu0 0
    %156 = vmatprep.subr.bf16.mxu0 0
    %157 = vmatpush1.bf16.msra.mxu0 0
    %158 = vmatprep.subr.bf16.mxu0 0
    %159 = vmatpush1.bf16.msra.mxu0 0
    %160 = vmatprep.subr.bf16.mxu0 0
    %161 = vmatpush1.bf16.msra.mxu0 0
    %162 = vmatprep.subr.bf16.mxu0 0
    %163 = vmatpush1.bf16.msra.mxu0 0
    %164 = vmatprep.subr.bf16.mxu0 0
    %165 = vmatpush1.bf16.msra.mxu0 0
    %166 = vmatprep.subr.bf16.mxu0 0
    %167 = vmatpush1.bf16.msra.mxu0 0
    %168 = vmatprep.subr.bf16.mxu0 0
    %169 = vmatpush1.bf16.msra.mxu0 0
    %170 = vmatprep.subr.bf16.mxu0 0
    %171 = vmatpush1.bf16.msra.mxu0 0
    %172 = vmatprep.subr.bf16.mxu0 0
    %173 = vmatpush1.bf16.msra.mxu0 0
    %174 = vmatprep.mubr.bf16.mxu0 0
    %175 = vmatmul.mubr.bf16.gmra.mrb[0].mxu0 %v140
    %v176 = vpop.f32.mrb[0].mxu0
    %v177 = vadd.f32 %v111, %v176
    %v178 = vpop.f32.mrb[0].mxu0
    %v179 = vadd.f32 %v115, %v178
    %v180 = vpop.f32.mrb[0].mxu0
    %v181 = vpop.f32.mrb[0].mxu0
    %182 = vdwg.mxu0
    %v183 = vmax.f32 %v177, 0.0
    %v184 = vmax.f32 %v179, 0.0
    %v185 = vpack.c.bf16 %v183, %v183
    %v186 = vpack.c.bf16 %v184, %v184
    %v187 = vld [vmem:[#allocation7] sm:$0xff]
    %v188 = vld [vmem:[#allocation7 + $0x8] sm:$0xff]
    %v189 = vld [vmem:[#allocation7 + $0x10] sm:$0xff]
    %v190 = vld [vmem:[#allocation7 + $0x18] sm:$0xff]
    %v191 = vld [vmem:[#allocation7 + $0x20] sm:$0xff]
    %v192 = vld [vmem:[#allocation7 + $0x28] sm:$0xff]
    %v193 = vld [vmem:[#allocation7 + $0x30] sm:$0xff]
    %v194 = vld [vmem:[#allocation7 + $0x38] sm:$0xff]
    %v195 = vld [vmem:[#allocation7 + $0x40] sm:$0xff]
    %v196 = vld [vmem:[#allocation7 + $0x48] sm:$0xff]
    %v197 = vld [vmem:[#allocation7 + $0x50] sm:$0xff]
    %v198 = vld [vmem:[#allocation7 + $0x58] sm:$0xff]
    %v199 = vld [vmem:[#allocation7 + $0x60] sm:$0xff]
    %v200 = vld [vmem:[#allocation7 + $0x68] sm:$0xff]
    %v201 = vld [vmem:[#allocation7 + $0x70] sm:$0xff]
    %v202 = vld [vmem:[#allocation7 + $0x78] sm:$0xff]
    %v203 = vld [vmem:[#allocation7 + $0x80] sm:$0xff]
    %v204 = vld [vmem:[#allocation7 + $0x88] sm:$0xff]
    %v205 = vld [vmem:[#allocation7 + $0x90] sm:$0xff]
    %v206 = vld [vmem:[#allocation7 + $0x98] sm:$0xff]
    %v207 = vld [vmem:[#allocation7 + $0xa0] sm:$0xff]
    %v208 = vld [vmem:[#allocation7 + $0xa8] sm:$0xff]
    %v209 = vld [vmem:[#allocation7 + $0xb0] sm:$0xff]
    %v210 = vld [vmem:[#allocation7 + $0xb8] sm:$0xff]
    %v211 = vld [vmem:[#allocation7 + $0xc0] sm:$0xff]
    %v212 = vld [vmem:[#allocation7 + $0xc8] sm:$0xff]
    %v213 = vld [vmem:[#allocation7 + $0xd0] sm:$0xff]
    %v214 = vld [vmem:[#allocation7 + $0xd8] sm:$0xff]
    %v215 = vld [vmem:[#allocation7 + $0xe0] sm:$0xff]
    %v216 = vld [vmem:[#allocation7 + $0xe8] sm:$0xff]
    %v217 = vld [vmem:[#allocation7 + $0xf0] sm:$0xff]
    %v218 = vld [vmem:[#allocation7 + $0xf8] sm:$0xff]
    %v219 = vld [vmem:[%s4] sm:$0x3]
    %v221 = vlaneseq
    %v222 = vshrl.u32 %v221, 7
    %v223 = vsub.s32 0, %v222
    %v224 = vrot.slane %v219, %v223
    %v225 = vlaneseq
    %v226 = vshrl.u32 %v225, 7
    %v227 = vsub.s32 1, %v226
    %v228 = vrot.slane %v219, %v227
    %v263 = vunpack.c.l.b16 %v187
    %v264 = vunpack.c.h.b16 %v187
    %v265 = vunpack.c.l.b16 %v188
    %v266 = vunpack.c.h.b16 %v188
    %v267 = vunpack.c.l.b16 %v189
    %v268 = vunpack.c.h.b16 %v189
    %v269 = vunpack.c.l.b16 %v190
    %v270 = vunpack.c.h.b16 %v190
    %v271 = vunpack.c.l.b16 %v191
    %v272 = vunpack.c.h.b16 %v191
    %v273 = vunpack.c.l.b16 %v192
    %v274 = vunpack.c.h.b16 %v192
    %v275 = vunpack.c.l.b16 %v193
    %v276 = vunpack.c.h.b16 %v193
    %v277 = vunpack.c.l.b16 %v194
    %v278 = vunpack.c.h.b16 %v194
    %v279 = vunpack.c.l.b16 %v195
    %v280 = vunpack.c.h.b16 %v195
    %v281 = vunpack.c.l.b16 %v196
    %v282 = vunpack.c.h.b16 %v196
    %v283 = vunpack.c.l.b16 %v197
    %v284 = vunpack.c.h.b16 %v197
    %v285 = vunpack.c.l.b16 %v198
    %v286 = vunpack.c.h.b16 %v198
    %v287 = vunpack.c.l.b16 %v199
    %v288 = vunpack.c.h.b16 %v199
    %v289 = vunpack.c.l.b16 %v200
    %v290 = vunpack.c.h.b16 %v200
    %v291 = vunpack.c.l.b16 %v201
    %v292 = vunpack.c.h.b16 %v201
    %v293 = vunpack.c.l.b16 %v202
    %v294 = vunpack.c.h.b16 %v202
    %v295 = vunpack.c.l.b16 %v203
    %v296 = vunpack.c.h.b16 %v203
    %v297 = vunpack.c.l.b16 %v204
    %v298 = vunpack.c.h.b16 %v204
    %v299 = vunpack.c.l.b16 %v205
    %v300 = vunpack.c.h.b16 %v205
    %v301 = vunpack.c.l.b16 %v206
    %v302 = vunpack.c.h.b16 %v206
    %v303 = vunpack.c.l.b16 %v207
    %v304 = vunpack.c.h.b16 %v207
    %v305 = vunpack.c.l.b16 %v208
    %v306 = vunpack.c.h.b16 %v208
    %v307 = vunpack.c.l.b16 %v209
    %v308 = vunpack.c.h.b16 %v209
    %v309 = vunpack.c.l.b16 %v210
    %v310 = vunpack.c.h.b16 %v210
    %v311 = vunpack.c.l.b16 %v211
    %v312 = vunpack.c.h.b16 %v211
    %v313 = vunpack.c.l.b16 %v212
    %v314 = vunpack.c.h.b16 %v212
    %v315 = vunpack.c.l.b16 %v213
    %v316 = vunpack.c.h.b16 %v213
    %v317 = vunpack.c.l.b16 %v214
    %v318 = vunpack.c.h.b16 %v214
    %v319 = vunpack.c.l.b16 %v215
    %v320 = vunpack.c.h.b16 %v215
    %v321 = vunpack.c.l.b16 %v216
    %v322 = vunpack.c.h.b16 %v216
    %v323 = vunpack.c.l.b16 %v217
    %v324 = vunpack.c.h.b16 %v217
    %v325 = vunpack.c.l.b16 %v218
    %v326 = vunpack.c.h.b16 %v218
    %v327 = vpack.c.b16 %v265, %v263
    %v328 = vpack.c.b16 %v266, %v264
    %v329 = vpack.c.b16 %v269, %v267
    %v330 = vpack.c.b16 %v270, %v268
    %v331 = vpack.c.b16 %v273, %v271
    %v332 = vpack.c.b16 %v274, %v272
    %v333 = vpack.c.b16 %v277, %v275
    %v334 = vpack.c.b16 %v278, %v276
    %v335 = vpack.c.b16 %v281, %v279
    %v336 = vpack.c.b16 %v282, %v280
    %v337 = vpack.c.b16 %v285, %v283
    %v338 = vpack.c.b16 %v286, %v284
    %v339 = vpack.c.b16 %v289, %v287
    %v340 = vpack.c.b16 %v290, %v288
    %v341 = vpack.c.b16 %v293, %v291
    %v342 = vpack.c.b16 %v294, %v292
    %v343 = vpack.c.b16 %v297, %v295
    %v344 = vpack.c.b16 %v298, %v296
    %v345 = vpack.c.b16 %v301, %v299
    %v346 = vpack.c.b16 %v302, %v300
    %v347 = vpack.c.b16 %v305, %v303
    %v348 = vpack.c.b16 %v306, %v304
    %v349 = vpack.c.b16 %v309, %v307
    %v350 = vpack.c.b16 %v310, %v308
    %v351 = vpack.c.b16 %v313, %v311
    %v352 = vpack.c.b16 %v314, %v312
    %v353 = vpack.c.b16 %v317, %v315
    %v354 = vpack.c.b16 %v318, %v316
    %v355 = vpack.c.b16 %v321, %v319
    %v356 = vpack.c.b16 %v322, %v320
    %v357 = vpack.c.b16 %v325, %v323
    %v358 = vpack.c.b16 %v326, %v324
    %391 = vmatprep.subr.bf16.mxu0 %v328
    %392 = vmatpush1.bf16.msra.mxu0 %v327
    %393 = vmatprep.subr.bf16.mxu0 %v330
    %394 = vmatpush1.bf16.msra.mxu0 %v329
    %395 = vmatprep.subr.bf16.mxu0 %v332
    %396 = vmatpush1.bf16.msra.mxu0 %v331
    %397 = vmatprep.subr.bf16.mxu0 %v334
    %398 = vmatpush1.bf16.msra.mxu0 %v333
    %399 = vmatprep.subr.bf16.mxu0 %v336
    %400 = vmatpush1.bf16.msra.mxu0 %v335
    %401 = vmatprep.subr.bf16.mxu0 %v338
    %402 = vmatpush1.bf16.msra.mxu0 %v337
    %403 = vmatprep.subr.bf16.mxu0 %v340
    %404 = vmatpush1.bf16.msra.mxu0 %v339
    %405 = vmatprep.subr.bf16.mxu0 %v342
    %406 = vmatpush1.bf16.msra.mxu0 %v341
    %407 = vmatprep.subr.bf16.mxu0 %v344
    %408 = vmatpush1.bf16.msra.mxu0 %v343
    %409 = vmatprep.subr.bf16.mxu0 %v346
    %410 = vmatpush1.bf16.msra.mxu0 %v345
    %411 = vmatprep.subr.bf16.mxu0 %v348
    %412 = vmatpush1.bf16.msra.mxu0 %v347
    %413 = vmatprep.subr.bf16.mxu0 %v350
    %414 = vmatpush1.bf16.msra.mxu0 %v349
    %415 = vmatprep.subr.bf16.mxu0 %v352
    %416 = vmatpush1.bf16.msra.mxu0 %v351
    %417 = vmatprep.subr.bf16.mxu0 %v354
    %418 = vmatpush1.bf16.msra.mxu0 %v353
    %419 = vmatprep.subr.bf16.mxu0 %v356
    %420 = vmatpush1.bf16.msra.mxu0 %v355
    %421 = vmatprep.subr.bf16.mxu0 %v358
    %422 = vmatpush1.bf16.msra.mxu0 %v357
    %423 = vmatprep.mubr.bf16.mxu0 %v186
    %424 = vmatmul.mubr.bf16.gmra.mrb[0].mxu0 %v185
    %v425 = vpop.f32.mrb[0].mxu0
    %v426 = vadd.f32 %v224, %v425
    %v427 = vpop.f32.mrb[0].mxu0
    %v428 = vadd.f32 %v228, %v427
    %v429 = vpop.f32.mrb[0].mxu0
    %v430 = vpop.f32.mrb[0].mxu0
    %431 = vdwg.mxu0
    %v432 = vmax.f32 %v426, 0.0
    %v433 = vmax.f32 %v428, 0.0
    %v434 = vpack.c.bf16 %v432, %v432
    %v435 = vpack.c.bf16 %v433, %v433
    %v436 = vld [vmem:[#allocation8] sm:$0xff]
    %v437 = vld [vmem:[#allocation8 + $0x8] sm:$0xff]
    %v438 = vld [vmem:[#allocation8 + $0x10] sm:$0xff]
    %v439 = vld [vmem:[#allocation8 + $0x18] sm:$0xff]
    %v440 = vld [vmem:[#allocation8 + $0x20] sm:$0xff]
    %v441 = vld [vmem:[#allocation8 + $0x28] sm:$0xff]
    %v442 = vld [vmem:[#allocation8 + $0x30] sm:$0xff]
    %v443 = vld [vmem:[#allocation8 + $0x38] sm:$0xff]
    %v444 = vld [vmem:[#allocation8 + $0x40] sm:$0xff]
    %v445 = vld [vmem:[#allocation8 + $0x48] sm:$0xff]
    %v446 = vld [vmem:[#allocation8 + $0x50] sm:$0xff]
    %v447 = vld [vmem:[#allocation8 + $0x58] sm:$0xff]
    %v448 = vld [vmem:[#allocation8 + $0x60] sm:$0xff]
    %v449 = vld [vmem:[#allocation8 + $0x68] sm:$0xff]
    %v450 = vld [vmem:[#allocation8 + $0x70] sm:$0xff]
    %v451 = vld [vmem:[#allocation8 + $0x78] sm:$0xff]
    %v452 = vld [vmem:[#allocation8 + $0x80] sm:$0xff]
    %v453 = vld [vmem:[#allocation8 + $0x88] sm:$0xff]
    %v454 = vld [vmem:[#allocation8 + $0x90] sm:$0xff]
    %v455 = vld [vmem:[#allocation8 + $0x98] sm:$0xff]
    %v456 = vld [vmem:[#allocation8 + $0xa0] sm:$0xff]
    %v457 = vld [vmem:[#allocation8 + $0xa8] sm:$0xff]
    %v458 = vld [vmem:[#allocation8 + $0xb0] sm:$0xff]
    %v459 = vld [vmem:[#allocation8 + $0xb8] sm:$0xff]
    %v460 = vld [vmem:[#allocation8 + $0xc0] sm:$0xff]
    %v461 = vld [vmem:[#allocation8 + $0xc8] sm:$0xff]
    %v462 = vld [vmem:[#allocation8 + $0xd0] sm:$0xff]
    %v463 = vld [vmem:[#allocation8 + $0xd8] sm:$0xff]
    %v464 = vld [vmem:[#allocation8 + $0xe0] sm:$0xff]
    %v465 = vld [vmem:[#allocation8 + $0xe8] sm:$0xff]
    %v466 = vld [vmem:[#allocation8 + $0xf0] sm:$0xff]
    %v467 = vld [vmem:[#allocation8 + $0xf8] sm:$0xff]
    %v468 = vld [vmem:[%s6] sm:$0x3]
    %v470 = vlaneseq
    %v471 = vshrl.u32 %v470, 7
    %v472 = vsub.s32 0, %v471
    %v473 = vrot.slane %v468, %v472
    %v474 = vlaneseq
    %v475 = vshrl.u32 %v474, 7
    %v476 = vsub.s32 1, %v475
    %v477 = vrot.slane %v468, %v476
    %v512 = vunpack.c.l.b16 %v436
    %v513 = vunpack.c.h.b16 %v436
    %v514 = vunpack.c.l.b16 %v437
    %v515 = vunpack.c.h.b16 %v437
    %v516 = vunpack.c.l.b16 %v438
    %v517 = vunpack.c.h.b16 %v438
    %v518 = vunpack.c.l.b16 %v439
    %v519 = vunpack.c.h.b16 %v439
    %v520 = vunpack.c.l.b16 %v440
    %v521 = vunpack.c.h.b16 %v440
    %v522 = vunpack.c.l.b16 %v441
    %v523 = vunpack.c.h.b16 %v441
    %v524 = vunpack.c.l.b16 %v442
    %v525 = vunpack.c.h.b16 %v442
    %v526 = vunpack.c.l.b16 %v443
    %v527 = vunpack.c.h.b16 %v443
    %v528 = vunpack.c.l.b16 %v444
    %v529 = vunpack.c.h.b16 %v444
    %v530 = vunpack.c.l.b16 %v445
    %v531 = vunpack.c.h.b16 %v445
    %v532 = vunpack.c.l.b16 %v446
    %v533 = vunpack.c.h.b16 %v446
    %v534 = vunpack.c.l.b16 %v447
    %v535 = vunpack.c.h.b16 %v447
    %v536 = vunpack.c.l.b16 %v448
    %v537 = vunpack.c.h.b16 %v448
    %v538 = vunpack.c.l.b16 %v449
    %v539 = vunpack.c.h.b16 %v449
    %v540 = vunpack.c.l.b16 %v450
    %v541 = vunpack.c.h.b16 %v450
    %v542 = vunpack.c.l.b16 %v451
    %v543 = vunpack.c.h.b16 %v451
    %v544 = vunpack.c.l.b16 %v452
    %v545 = vunpack.c.h.b16 %v452
    %v546 = vunpack.c.l.b16 %v453
    %v547 = vunpack.c.h.b16 %v453
    %v548 = vunpack.c.l.b16 %v454
    %v549 = vunpack.c.h.b16 %v454
    %v550 = vunpack.c.l.b16 %v455
    %v551 = vunpack.c.h.b16 %v455
    %v552 = vunpack.c.l.b16 %v456
    %v553 = vunpack.c.h.b16 %v456
    %v554 = vunpack.c.l.b16 %v457
    %v555 = vunpack.c.h.b16 %v457
    %v556 = vunpack.c.l.b16 %v458
    %v557 = vunpack.c.h.b16 %v458
    %v558 = vunpack.c.l.b16 %v459
    %v559 = vunpack.c.h.b16 %v459
    %v560 = vunpack.c.l.b16 %v460
    %v561 = vunpack.c.h.b16 %v460
    %v562 = vunpack.c.l.b16 %v461
    %v563 = vunpack.c.h.b16 %v461
    %v564 = vunpack.c.l.b16 %v462
    %v565 = vunpack.c.h.b16 %v462
    %v566 = vunpack.c.l.b16 %v463
    %v567 = vunpack.c.h.b16 %v463
    %v568 = vunpack.c.l.b16 %v464
    %v569 = vunpack.c.h.b16 %v464
    %v570 = vunpack.c.l.b16 %v465
    %v571 = vunpack.c.h.b16 %v465
    %v572 = vunpack.c.l.b16 %v466
    %v573 = vunpack.c.h.b16 %v466
    %v574 = vunpack.c.l.b16 %v467
    %v575 = vunpack.c.h.b16 %v467
    %v576 = vpack.c.b16 %v514, %v512
    %v577 = vpack.c.b16 %v515, %v513
    %v578 = vpack.c.b16 %v518, %v516
    %v579 = vpack.c.b16 %v519, %v517
    %v580 = vpack.c.b16 %v522, %v520
    %v581 = vpack.c.b16 %v523, %v521
    %v582 = vpack.c.b16 %v526, %v524
    %v583 = vpack.c.b16 %v527, %v525
    %v584 = vpack.c.b16 %v530, %v528
    %v585 = vpack.c.b16 %v531, %v529
    %v586 = vpack.c.b16 %v534, %v532
    %v587 = vpack.c.b16 %v535, %v533
    %v588 = vpack.c.b16 %v538, %v536
    %v589 = vpack.c.b16 %v539, %v537
    %v590 = vpack.c.b16 %v542, %v540
    %v591 = vpack.c.b16 %v543, %v541
    %v592 = vpack.c.b16 %v546, %v544
    %v593 = vpack.c.b16 %v547, %v545
    %v594 = vpack.c.b16 %v550, %v548
    %v595 = vpack.c.b16 %v551, %v549
    %v596 = vpack.c.b16 %v554, %v552
    %v597 = vpack.c.b16 %v555, %v553
    %v598 = vpack.c.b16 %v558, %v556
    %v599 = vpack.c.b16 %v559, %v557
    %v600 = vpack.c.b16 %v562, %v560
    %v601 = vpack.c.b16 %v563, %v561
    %v602 = vpack.c.b16 %v566, %v564
    %v603 = vpack.c.b16 %v567, %v565
    %v604 = vpack.c.b16 %v570, %v568
    %v605 = vpack.c.b16 %v571, %v569
    %v606 = vpack.c.b16 %v574, %v572
    %v607 = vpack.c.b16 %v575, %v573
    %640 = vmatprep.subr.bf16.mxu0 %v577
    %641 = vmatpush1.bf16.msra.mxu0 %v576
    %642 = vmatprep.subr.bf16.mxu0 %v579
    %643 = vmatpush1.bf16.msra.mxu0 %v578
    %644 = vmatprep.subr.bf16.mxu0 %v581
    %645 = vmatpush1.bf16.msra.mxu0 %v580
    %646 = vmatprep.subr.bf16.mxu0 %v583
    %647 = vmatpush1.bf16.msra.mxu0 %v582
    %648 = vmatprep.subr.bf16.mxu0 %v585
    %649 = vmatpush1.bf16.msra.mxu0 %v584
    %650 = vmatprep.subr.bf16.mxu0 %v587
    %651 = vmatpush1.bf16.msra.mxu0 %v586
    %652 = vmatprep.subr.bf16.mxu0 %v589
    %653 = vmatpush1.bf16.msra.mxu0 %v588
    %654 = vmatprep.subr.bf16.mxu0 %v591
    %655 = vmatpush1.bf16.msra.mxu0 %v590
    %656 = vmatprep.subr.bf16.mxu0 %v593
    %657 = vmatpush1.bf16.msra.mxu0 %v592
    %658 = vmatprep.subr.bf16.mxu0 %v595
    %659 = vmatpush1.bf16.msra.mxu0 %v594
    %660 = vmatprep.subr.bf16.mxu0 %v597
    %661 = vmatpush1.bf16.msra.mxu0 %v596
    %662 = vmatprep.subr.bf16.mxu0 %v599
    %663 = vmatpush1.bf16.msra.mxu0 %v598
    %664 = vmatprep.subr.bf16.mxu0 %v601
    %665 = vmatpush1.bf16.msra.mxu0 %v600
    %666 = vmatprep.subr.bf16.mxu0 %v603
    %667 = vmatpush1.bf16.msra.mxu0 %v602
    %668 = vmatprep.subr.bf16.mxu0 %v605
    %669 = vmatpush1.bf16.msra.mxu0 %v604
    %670 = vmatprep.subr.bf16.mxu0 %v607
    %671 = vmatpush1.bf16.msra.mxu0 %v606
    %672 = vmatprep.mubr.bf16.mxu0 %v435
    %673 = vmatmul.mubr.bf16.gmra.mrb[0].mxu0 %v434
    %v674 = vpop.f32.mrb[0].mxu0
    %v675 = vadd.f32 %v473, %v674
    %v676 = vpop.f32.mrb[0].mxu0
    %v677 = vadd.f32 %v477, %v676
    %v678 = vpop.f32.mrb[0].mxu0
    %v679 = vpop.f32.mrb[0].mxu0
    %680 = vdwg.mxu0
    %v681 = vmax.f32 %v675, 0.0
    %v682 = vmax.f32 %v677, 0.0
    %v683 = vadd.f32 %v183, %v681
    %v684 = vadd.f32 %v184, %v682
    %v685 = vpack.c.bf16 %v683, %v683
    %v686 = vpack.c.bf16 %v684, %v684
    %s687 = scalar_lea.vmem [#allocation7], 256
    %v688 = vld [vmem:[%s687] sm:$0xff]
    %v689 = vld [vmem:[%s687 + $0x8] sm:$0xff]
    %v690 = vld [vmem:[%s687 + $0x10] sm:$0xff]
    %v691 = vld [vmem:[%s687 + $0x18] sm:$0xff]
    %v692 = vld [vmem:[%s687 + $0x20] sm:$0xff]
    %v693 = vld [vmem:[%s687 + $0x28] sm:$0xff]
    %v694 = vld [vmem:[%s687 + $0x30] sm:$0xff]
    %v695 = vld [vmem:[%s687 + $0x38] sm:$0xff]
    %v696 = vld [vmem:[%s687 + $0x40] sm:$0xff]
    %v697 = vld [vmem:[%s687 + $0x48] sm:$0xff]
    %v698 = vld [vmem:[%s687 + $0x50] sm:$0xff]
    %v699 = vld [vmem:[%s687 + $0x58] sm:$0xff]
    %v700 = vld [vmem:[%s687 + $0x60] sm:$0xff]
    %v701 = vld [vmem:[%s687 + $0x68] sm:$0xff]
    %v702 = vld [vmem:[%s687 + $0x70] sm:$0xff]
    %v703 = vld [vmem:[%s687 + $0x78] sm:$0xff]
    %v704 = vld [vmem:[%s687 + $0x80] sm:$0xff]
    %v705 = vld [vmem:[%s687 + $0x88] sm:$0xff]
    %v706 = vld [vmem:[%s687 + $0x90] sm:$0xff]
    %v707 = vld [vmem:[%s687 + $0x98] sm:$0xff]
    %v708 = vld [vmem:[%s687 + $0xa0] sm:$0xff]
    %v709 = vld [vmem:[%s687 + $0xa8] sm:$0xff]
    %v710 = vld [vmem:[%s687 + $0xb0] sm:$0xff]
    %v711 = vld [vmem:[%s687 + $0xb8] sm:$0xff]
    %v712 = vld [vmem:[%s687 + $0xc0] sm:$0xff]
    %v713 = vld [vmem:[%s687 + $0xc8] sm:$0xff]
    %v714 = vld [vmem:[%s687 + $0xd0] sm:$0xff]
    %v715 = vld [vmem:[%s687 + $0xd8] sm:$0xff]
    %v716 = vld [vmem:[%s687 + $0xe0] sm:$0xff]
    %v717 = vld [vmem:[%s687 + $0xe8] sm:$0xff]
    %v718 = vld [vmem:[%s687 + $0xf0] sm:$0xff]
    %v719 = vld [vmem:[%s687 + $0xf8] sm:$0xff]
    %s720 = scalar_lea.vmem %s4, 2
    %v721 = vld [vmem:[%s720] sm:$0x3]
    %v723 = vlaneseq
    %v724 = vshrl.u32 %v723, 7
    %v725 = vsub.s32 0, %v724
    %v726 = vrot.slane %v721, %v725
    %v727 = vlaneseq
    %v728 = vshrl.u32 %v727, 7
    %v729 = vsub.s32 1, %v728
    %v730 = vrot.slane %v721, %v729
    %v765 = vunpack.c.l.b16 %v688
    %v766 = vunpack.c.h.b16 %v688
    %v767 = vunpack.c.l.b16 %v689
    %v768 = vunpack.c.h.b16 %v689
    %v769 = vunpack.c.l.b16 %v690
    %v770 = vunpack.c.h.b16 %v690
    %v771 = vunpack.c.l.b16 %v691
    %v772 = vunpack.c.h.b16 %v691
    %v773 = vunpack.c.l.b16 %v692
    %v774 = vunpack.c.h.b16 %v692
    %v775 = vunpack.c.l.b16 %v693
    %v776 = vunpack.c.h.b16 %v693
    %v777 = vunpack.c.l.b16 %v694
    %v778 = vunpack.c.h.b16 %v694
    %v779 = vunpack.c.l.b16 %v695
    %v780 = vunpack.c.h.b16 %v695
    %v781 = vunpack.c.l.b16 %v696
    %v782 = vunpack.c.h.b16 %v696
    %v783 = vunpack.c.l.b16 %v697
    %v784 = vunpack.c.h.b16 %v697
    %v785 = vunpack.c.l.b16 %v698
    %v786 = vunpack.c.h.b16 %v698
    %v787 = vunpack.c.l.b16 %v699
    %v788 = vunpack.c.h.b16 %v699
    %v789 = vunpack.c.l.b16 %v700
    %v790 = vunpack.c.h.b16 %v700
    %v791 = vunpack.c.l.b16 %v701
    %v792 = vunpack.c.h.b16 %v701
    %v793 = vunpack.c.l.b16 %v702
    %v794 = vunpack.c.h.b16 %v702
    %v795 = vunpack.c.l.b16 %v703
    %v796 = vunpack.c.h.b16 %v703
    %v797 = vunpack.c.l.b16 %v704
    %v798 = vunpack.c.h.b16 %v704
    %v799 = vunpack.c.l.b16 %v705
    %v800 = vunpack.c.h.b16 %v705
    %v801 = vunpack.c.l.b16 %v706
    %v802 = vunpack.c.h.b16 %v706
    %v803 = vunpack.c.l.b16 %v707
    %v804 = vunpack.c.h.b16 %v707
    %v805 = vunpack.c.l.b16 %v708
    %v806 = vunpack.c.h.b16 %v708
    %v807 = vunpack.c.l.b16 %v709
    %v808 = vunpack.c.h.b16 %v709
    %v809 = vunpack.c.l.b16 %v710
    %v810 = vunpack.c.h.b16 %v710
    %v811 = vunpack.c.l.b16 %v711
    %v812 = vunpack.c.h.b16 %v711
    %v813 = vunpack.c.l.b16 %v712
    %v814 = vunpack.c.h.b16 %v712
    %v815 = vunpack.c.l.b16 %v713
    %v816 = vunpack.c.h.b16 %v713
    %v817 = vunpack.c.l.b16 %v714
    %v818 = vunpack.c.h.b16 %v714
    %v819 = vunpack.c.l.b16 %v715
    %v820 = vunpack.c.h.b16 %v715
    %v821 = vunpack.c.l.b16 %v716
    %v822 = vunpack.c.h.b16 %v716
    %v823 = vunpack.c.l.b16 %v717
    %v824 = vunpack.c.h.b16 %v717
    %v825 = vunpack.c.l.b16 %v718
    %v826 = vunpack.c.h.b16 %v718
    %v827 = vunpack.c.l.b16 %v719
    %v828 = vunpack.c.h.b16 %v719
    %v829 = vpack.c.b16 %v767, %v765
    %v830 = vpack.c.b16 %v768, %v766
    %v831 = vpack.c.b16 %v771, %v769
    %v832 = vpack.c.b16 %v772, %v770
    %v833 = vpack.c.b16 %v775, %v773
    %v834 = vpack.c.b16 %v776, %v774
    %v835 = vpack.c.b16 %v779, %v777
    %v836 = vpack.c.b16 %v780, %v778
    %v837 = vpack.c.b16 %v783, %v781
    %v838 = vpack.c.b16 %v784, %v782
    %v839 = vpack.c.b16 %v787, %v785
    %v840 = vpack.c.b16 %v788, %v786
    %v841 = vpack.c.b16 %v791, %v789
    %v842 = vpack.c.b16 %v792, %v790
    %v843 = vpack.c.b16 %v795, %v793
    %v844 = vpack.c.b16 %v796, %v794
    %v845 = vpack.c.b16 %v799, %v797
    %v846 = vpack.c.b16 %v800, %v798
    %v847 = vpack.c.b16 %v803, %v801
    %v848 = vpack.c.b16 %v804, %v802
    %v849 = vpack.c.b16 %v807, %v805
    %v850 = vpack.c.b16 %v808, %v806
    %v851 = vpack.c.b16 %v811, %v809
    %v852 = vpack.c.b16 %v812, %v810
    %v853 = vpack.c.b16 %v815, %v813
    %v854 = vpack.c.b16 %v816, %v814
    %v855 = vpack.c.b16 %v819, %v817
    %v856 = vpack.c.b16 %v820, %v818
    %v857 = vpack.c.b16 %v823, %v821
    %v858 = vpack.c.b16 %v824, %v822
    %v859 = vpack.c.b16 %v827, %v825
    %v860 = vpack.c.b16 %v828, %v826
    %893 = vmatprep.subr.bf16.mxu0 %v830
    %894 = vmatpush1.bf16.msra.mxu0 %v829
    %895 = vmatprep.subr.bf16.mxu0 %v832
    %896 = vmatpush1.bf16.msra.mxu0 %v831
    %897 = vmatprep.subr.bf16.mxu0 %v834
    %898 = vmatpush1.bf16.msra.mxu0 %v833
    %899 = vmatprep.subr.bf16.mxu0 %v836
    %900 = vmatpush1.bf16.msra.mxu0 %v835
    %901 = vmatprep.subr.bf16.mxu0 %v838
    %902 = vmatpush1.bf16.msra.mxu0 %v837
    %903 = vmatprep.subr.bf16.mxu0 %v840
    %904 = vmatpush1.bf16.msra.mxu0 %v839
    %905 = vmatprep.subr.bf16.mxu0 %v842
    %906 = vmatpush1.bf16.msra.mxu0 %v841
    %907 = vmatprep.subr.bf16.mxu0 %v844
    %908 = vmatpush1.bf16.msra.mxu0 %v843
    %909 = vmatprep.subr.bf16.mxu0 %v846
    %910 = vmatpush1.bf16.msra.mxu0 %v845
    %911 = vmatprep.subr.bf16.mxu0 %v848
    %912 = vmatpush1.bf16.msra.mxu0 %v847
    %913 = vmatprep.subr.bf16.mxu0 %v850
    %914 = vmatpush1.bf16.msra.mxu0 %v849
    %915 = vmatprep.subr.bf16.mxu0 %v852
    %916 = vmatpush1.bf16.msra.mxu0 %v851
    %917 = vmatprep.subr.bf16.mxu0 %v854
    %918 = vmatpush1.bf16.msra.mxu0 %v853
    %919 = vmatprep.subr.bf16.mxu0 %v856
    %920 = vmatpush1.bf16.msra.mxu0 %v855
    %921 = vmatprep.subr.bf16.mxu0 %v858
    %922 = vmatpush1.bf16.msra.mxu0 %v857
    %923 = vmatprep.subr.bf16.mxu0 %v860
    %924 = vmatpush1.bf16.msra.mxu0 %v859
    %925 = vmatprep.mubr.bf16.mxu0 %v686
    %926 = vmatmul.mubr.bf16.gmra.mrb[0].mxu0 %v685
    %v927 = vpop.f32.mrb[0].mxu0
    %v928 = vadd.f32 %v726, %v927
    %v929 = vpop.f32.mrb[0].mxu0
    %v930 = vadd.f32 %v730, %v929
    %v931 = vpop.f32.mrb[0].mxu0
    %v932 = vpop.f32.mrb[0].mxu0
    %933 = vdwg.mxu0
    %v934 = vmax.f32 %v928, 0.0
    %v935 = vmax.f32 %v930, 0.0
    %v936 = vpack.c.bf16 %v934, %v934
    %v937 = vpack.c.bf16 %v935, %v935
    %s938 = scalar_lea.vmem [#allocation8], 256
    %v939 = vld [vmem:[%s938] sm:$0xff]
    %v940 = vld [vmem:[%s938 + $0x8] sm:$0xff]
    %v941 = vld [vmem:[%s938 + $0x10] sm:$0xff]
    %v942 = vld [vmem:[%s938 + $0x18] sm:$0xff]
    %v943 = vld [vmem:[%s938 + $0x20] sm:$0xff]
    %v944 = vld [vmem:[%s938 + $0x28] sm:$0xff]
    %v945 = vld [vmem:[%s938 + $0x30] sm:$0xff]
    %v946 = vld [vmem:[%s938 + $0x38] sm:$0xff]
    %v947 = vld [vmem:[%s938 + $0x40] sm:$0xff]
    %v948 = vld [vmem:[%s938 + $0x48] sm:$0xff]
    %v949 = vld [vmem:[%s938 + $0x50] sm:$0xff]
    %v950 = vld [vmem:[%s938 + $0x58] sm:$0xff]
    %v951 = vld [vmem:[%s938 + $0x60] sm:$0xff]
    %v952 = vld [vmem:[%s938 + $0x68] sm:$0xff]
    %v953 = vld [vmem:[%s938 + $0x70] sm:$0xff]
    %v954 = vld [vmem:[%s938 + $0x78] sm:$0xff]
    %v955 = vld [vmem:[%s938 + $0x80] sm:$0xff]
    %v956 = vld [vmem:[%s938 + $0x88] sm:$0xff]
    %v957 = vld [vmem:[%s938 + $0x90] sm:$0xff]
    %v958 = vld [vmem:[%s938 + $0x98] sm:$0xff]
    %v959 = vld [vmem:[%s938 + $0xa0] sm:$0xff]
    %v960 = vld [vmem:[%s938 + $0xa8] sm:$0xff]
    %v961 = vld [vmem:[%s938 + $0xb0] sm:$0xff]
    %v962 = vld [vmem:[%s938 + $0xb8] sm:$0xff]
    %v963 = vld [vmem:[%s938 + $0xc0] sm:$0xff]
    %v964 = vld [vmem:[%s938 + $0xc8] sm:$0xff]
    %v965 = vld [vmem:[%s938 + $0xd0] sm:$0xff]
    %v966 = vld [vmem:[%s938 + $0xd8] sm:$0xff]
    %v967 = vld [vmem:[%s938 + $0xe0] sm:$0xff]
    %v968 = vld [vmem:[%s938 + $0xe8] sm:$0xff]
    %v969 = vld [vmem:[%s938 + $0xf0] sm:$0xff]
    %v970 = vld [vmem:[%s938 + $0xf8] sm:$0xff]
    %s971 = scalar_lea.vmem %s6, 2
    %v972 = vld [vmem:[%s971] sm:$0x3]
    %v974 = vlaneseq
    %v975 = vshrl.u32 %v974, 7
    %v976 = vsub.s32 0, %v975
    %v977 = vrot.slane %v972, %v976
    %v978 = vlaneseq
    %v979 = vshrl.u32 %v978, 7
    %v980 = vsub.s32 1, %v979
    %v981 = vrot.slane %v972, %v980
    %v1016 = vunpack.c.l.b16 %v939
    %v1017 = vunpack.c.h.b16 %v939
    %v1018 = vunpack.c.l.b16 %v940
    %v1019 = vunpack.c.h.b16 %v940
    %v1020 = vunpack.c.l.b16 %v941
    %v1021 = vunpack.c.h.b16 %v941
    %v1022 = vunpack.c.l.b16 %v942
    %v1023 = vunpack.c.h.b16 %v942
    %v1024 = vunpack.c.l.b16 %v943
    %v1025 = vunpack.c.h.b16 %v943
    %v1026 = vunpack.c.l.b16 %v944
    %v1027 = vunpack.c.h.b16 %v944
    %v1028 = vunpack.c.l.b16 %v945
    %v1029 = vunpack.c.h.b16 %v945
    %v1030 = vunpack.c.l.b16 %v946
    %v1031 = vunpack.c.h.b16 %v946
    %v1032 = vunpack.c.l.b16 %v947
    %v1033 = vunpack.c.h.b16 %v947
    %v1034 = vunpack.c.l.b16 %v948
    %v1035 = vunpack.c.h.b16 %v948
    %v1036 = vunpack.c.l.b16 %v949
    %v1037 = vunpack.c.h.b16 %v949
    %v1038 = vunpack.c.l.b16 %v950
    %v1039 = vunpack.c.h.b16 %v950
    %v1040 = vunpack.c.l.b16 %v951
    %v1041 = vunpack.c.h.b16 %v951
    %v1042 = vunpack.c.l.b16 %v952
    %v1043 = vunpack.c.h.b16 %v952
    %v1044 = vunpack.c.l.b16 %v953
    %v1045 = vunpack.c.h.b16 %v953
    %v1046 = vunpack.c.l.b16 %v954
    %v1047 = vunpack.c.h.b16 %v954
    %v1048 = vunpack.c.l.b16 %v955
    %v1049 = vunpack.c.h.b16 %v955
    %v1050 = vunpack.c.l.b16 %v956
    %v1051 = vunpack.c.h.b16 %v956
    %v1052 = vunpack.c.l.b16 %v957
    %v1053 = vunpack.c.h.b16 %v957
    %v1054 = vunpack.c.l.b16 %v958
    %v1055 = vunpack.c.h.b16 %v958
    %v1056 = vunpack.c.l.b16 %v959
    %v1057 = vunpack.c.h.b16 %v959
    %v1058 = vunpack.c.l.b16 %v960
    %v1059 = vunpack.c.h.b16 %v960
    %v1060 = vunpack.c.l.b16 %v961
    %v1061 = vunpack.c.h.b16 %v961
    %v1062 = vunpack.c.l.b16 %v962
    %v1063 = vunpack.c.h.b16 %v962
    %v1064 = vunpack.c.l.b16 %v963
    %v1065 = vunpack.c.h.b16 %v963
    %v1066 = vunpack.c.l.b16 %v964
    %v1067 = vunpack.c.h.b16 %v964
    %v1068 = vunpack.c.l.b16 %v965
    %v1069 = vunpack.c.h.b16 %v965
    %v1070 = vunpack.c.l.b16 %v966
    %v1071 = vunpack.c.h.b16 %v966
    %v1072 = vunpack.c.l.b16 %v967
    %v1073 = vunpack.c.h.b16 %v967
    %v1074 = vunpack.c.l.b16 %v968
    %v1075 = vunpack.c.h.b16 %v968
    %v1076 = vunpack.c.l.b16 %v969
    %v1077 = vunpack.c.h.b16 %v969
    %v1078 = vunpack.c.l.b16 %v970
    %v1079 = vunpack.c.h.b16 %v970
    %v1080 = vpack.c.b16 %v1018, %v1016
    %v1081 = vpack.c.b16 %v1019, %v1017
    %v1082 = vpack.c.b16 %v1022, %v1020
    %v1083 = vpack.c.b16 %v1023, %v1021
    %v1084 = vpack.c.b16 %v1026, %v1024
    %v1085 = vpack.c.b16 %v1027, %v1025
    %v1086 = vpack.c.b16 %v1030, %v1028
    %v1087 = vpack.c.b16 %v1031, %v1029
    %v1088 = vpack.c.b16 %v1034, %v1032
    %v1089 = vpack.c.b16 %v1035, %v1033
    %v1090 = vpack.c.b16 %v1038, %v1036
    %v1091 = vpack.c.b16 %v1039, %v1037
    %v1092 = vpack.c.b16 %v1042, %v1040
    %v1093 = vpack.c.b16 %v1043, %v1041
    %v1094 = vpack.c.b16 %v1046, %v1044
    %v1095 = vpack.c.b16 %v1047, %v1045
    %v1096 = vpack.c.b16 %v1050, %v1048
    %v1097 = vpack.c.b16 %v1051, %v1049
    %v1098 = vpack.c.b16 %v1054, %v1052
    %v1099 = vpack.c.b16 %v1055, %v1053
    %v1100 = vpack.c.b16 %v1058, %v1056
    %v1101 = vpack.c.b16 %v1059, %v1057
    %v1102 = vpack.c.b16 %v1062, %v1060
    %v1103 = vpack.c.b16 %v1063, %v1061
    %v1104 = vpack.c.b16 %v1066, %v1064
    %v1105 = vpack.c.b16 %v1067, %v1065
    %v1106 = vpack.c.b16 %v1070, %v1068
    %v1107 = vpack.c.b16 %v1071, %v1069
    %v1108 = vpack.c.b16 %v1074, %v1072
    %v1109 = vpack.c.b16 %v1075, %v1073
    %v1110 = vpack.c.b16 %v1078, %v1076
    %v1111 = vpack.c.b16 %v1079, %v1077
    %1144 = vmatprep.subr.bf16.mxu0 %v1081
    %1145 = vmatpush1.bf16.msra.mxu0 %v1080
    %1146 = vmatprep.subr.bf16.mxu0 %v1083
    %1147 = vmatpush1.bf16.msra.mxu0 %v1082
    %1148 = vmatprep.subr.bf16.mxu0 %v1085
    %1149 = vmatpush1.bf16.msra.mxu0 %v1084
    %1150 = vmatprep.subr.bf16.mxu0 %v1087
    %1151 = vmatpush1.bf16.msra.mxu0 %v1086
    %1152 = vmatprep.subr.bf16.mxu0 %v1089
    %1153 = vmatpush1.bf16.msra.mxu0 %v1088
    %1154 = vmatprep.subr.bf16.mxu0 %v1091
    %1155 = vmatpush1.bf16.msra.mxu0 %v1090
    %1156 = vmatprep.subr.bf16.mxu0 %v1093
    %1157 = vmatpush1.bf16.msra.mxu0 %v1092
    %1158 = vmatprep.subr.bf16.mxu0 %v1095
    %1159 = vmatpush1.bf16.msra.mxu0 %v1094
    %1160 = vmatprep.subr.bf16.mxu0 %v1097
    %1161 = vmatpush1.bf16.msra.mxu0 %v1096
    %1162 = vmatprep.subr.bf16.mxu0 %v1099
    %1163 = vmatpush1.bf16.msra.mxu0 %v1098
    %1164 = vmatprep.subr.bf16.mxu0 %v1101
    %1165 = vmatpush1.bf16.msra.mxu0 %v1100
    %1166 = vmatprep.subr.bf16.mxu0 %v1103
    %1167 = vmatpush1.bf16.msra.mxu0 %v1102
    %1168 = vmatprep.subr.bf16.mxu0 %v1105
    %1169 = vmatpush1.bf16.msra.mxu0 %v1104
    %1170 = vmatprep.subr.bf16.mxu0 %v1107
    %1171 = vmatpush1.bf16.msra.mxu0 %v1106
    %1172 = vmatprep.subr.bf16.mxu0 %v1109
    %1173 = vmatpush1.bf16.msra.mxu0 %v1108
    %1174 = vmatprep.subr.bf16.mxu0 %v1111
    %1175 = vmatpush1.bf16.msra.mxu0 %v1110
    %1176 = vmatprep.mubr.bf16.mxu0 %v937
    %1177 = vmatmul.mubr.bf16.gmra.mrb[0].mxu0 %v936
    %v1178 = vpop.f32.mrb[0].mxu0
    %v1179 = vadd.f32 %v977, %v1178
    %v1180 = vpop.f32.mrb[0].mxu0
    %v1181 = vadd.f32 %v981, %v1180
    %v1182 = vpop.f32.mrb[0].mxu0
    %v1183 = vpop.f32.mrb[0].mxu0
    %1184 = vdwg.mxu0
    %v1185 = vmax.f32 %v1179, 0.0
    %v1186 = vmax.f32 %v1181, 0.0
    %v1187 = vadd.f32 %v683, %v1185
    %v1188 = vadd.f32 %v684, %v1186
    %v1189 = vpack.c.bf16 %v1187, %v1187
    %v1190 = vpack.c.bf16 %v1188, %v1188
    %v1191 = vld [vmem:[#allocation10] sm:$0xf]
    %v1192 = vld [vmem:[#allocation10 + $0x4] sm:$0xf]
    %v1193 = vld [vmem:[#allocation10 + $0x8] sm:$0xf]
    %v1194 = vld [vmem:[#allocation10 + $0xc] sm:$0xf]
    %v1195 = vld [vmem:[#allocation10 + $0x10] sm:$0xf]
    %v1196 = vld [vmem:[#allocation10 + $0x14] sm:$0xf]
    %v1197 = vld [vmem:[#allocation10 + $0x18] sm:$0xf]
    %v1198 = vld [vmem:[#allocation10 + $0x1c] sm:$0xf]
    %v1199 = vld [vmem:[#allocation10 + $0x20] sm:$0xf]
    %v1200 = vld [vmem:[#allocation10 + $0x24] sm:$0xf]
    %v1201 = vld [vmem:[#allocation10 + $0x28] sm:$0xf]
    %v1202 = vld [vmem:[#allocation10 + $0x2c] sm:$0xf]
    %v1203 = vld [vmem:[#allocation10 + $0x30] sm:$0xf]
    %v1204 = vld [vmem:[#allocation10 + $0x34] sm:$0xf]
    %v1205 = vld [vmem:[#allocation10 + $0x38] sm:$0xf]
    %v1206 = vld [vmem:[#allocation10 + $0x3c] sm:$0xf]
    %v1207 = vld [vmem:[#allocation10 + $0x40] sm:$0xf]
    %v1208 = vld [vmem:[#allocation10 + $0x44] sm:$0xf]
    %v1209 = vld [vmem:[#allocation10 + $0x48] sm:$0xf]
    %v1210 = vld [vmem:[#allocation10 + $0x4c] sm:$0xf]
    %v1211 = vld [vmem:[#allocation10 + $0x50] sm:$0xf]
    %v1212 = vld [vmem:[#allocation10 + $0x54] sm:$0xf]
    %v1213 = vld [vmem:[#allocation10 + $0x58] sm:$0xf]
    %v1214 = vld [vmem:[#allocation10 + $0x5c] sm:$0xf]
    %v1215 = vld [vmem:[#allocation10 + $0x60] sm:$0xf]
    %v1216 = vld [vmem:[#allocation10 + $0x64] sm:$0xf]
    %v1217 = vld [vmem:[#allocation10 + $0x68] sm:$0xf]
    %v1218 = vld [vmem:[#allocation10 + $0x6c] sm:$0xf]
    %v1219 = vld [vmem:[#allocation10 + $0x70] sm:$0xf]
    %v1220 = vld [vmem:[#allocation10 + $0x74] sm:$0xf]
    %v1221 = vld [vmem:[#allocation10 + $0x78] sm:$0xf]
    %v1222 = vld [vmem:[#allocation10 + $0x7c] sm:$0xf]
    %v1223 = vld [vmem:[%s8] sm:$0x1]
    %v1225 = vlaneseq
    %v1226 = vshrl.u32 %v1225, 7
    %v1227 = vsub.s32 0, %v1226
    %v1228 = vrot.slane %v1223, %v1227
    %v1262 = vunpack.c.l.b16 %v1191
    %v1263 = vunpack.c.l.b16 %v1192
    %v1264 = vunpack.c.l.b16 %v1193
    %v1265 = vunpack.c.l.b16 %v1194
    %v1266 = vunpack.c.l.b16 %v1195
    %v1267 = vunpack.c.l.b16 %v1196
    %v1268 = vunpack.c.l.b16 %v1197
    %v1269 = vunpack.c.l.b16 %v1198
    %v1270 = vunpack.c.l.b16 %v1199
    %v1271 = vunpack.c.l.b16 %v1200
    %v1272 = vunpack.c.l.b16 %v1201
    %v1273 = vunpack.c.l.b16 %v1202
    %v1274 = vunpack.c.l.b16 %v1203
    %v1275 = vunpack.c.l.b16 %v1204
    %v1276 = vunpack.c.l.b16 %v1205
    %v1277 = vunpack.c.l.b16 %v1206
    %v1278 = vunpack.c.l.b16 %v1207
    %v1279 = vunpack.c.l.b16 %v1208
    %v1280 = vunpack.c.l.b16 %v1209
    %v1281 = vunpack.c.l.b16 %v1210
    %v1282 = vunpack.c.l.b16 %v1211
    %v1283 = vunpack.c.l.b16 %v1212
    %v1284 = vunpack.c.l.b16 %v1213
    %v1285 = vunpack.c.l.b16 %v1214
    %v1286 = vunpack.c.l.b16 %v1215
    %v1287 = vunpack.c.l.b16 %v1216
    %v1288 = vunpack.c.l.b16 %v1217
    %v1289 = vunpack.c.l.b16 %v1218
    %v1290 = vunpack.c.l.b16 %v1219
    %v1291 = vunpack.c.l.b16 %v1220
    %v1292 = vunpack.c.l.b16 %v1221
    %v1293 = vunpack.c.l.b16 %v1222
    %v1294 = vpack.c.b16 %v1263, %v1262
    %v1295 = vpack.c.b16 %v1265, %v1264
    %v1296 = vpack.c.b16 %v1267, %v1266
    %v1297 = vpack.c.b16 %v1269, %v1268
    %v1298 = vpack.c.b16 %v1271, %v1270
    %v1299 = vpack.c.b16 %v1273, %v1272
    %v1300 = vpack.c.b16 %v1275, %v1274
    %v1301 = vpack.c.b16 %v1277, %v1276
    %v1302 = vpack.c.b16 %v1279, %v1278
    %v1303 = vpack.c.b16 %v1281, %v1280
    %v1304 = vpack.c.b16 %v1283, %v1282
    %v1305 = vpack.c.b16 %v1285, %v1284
    %v1306 = vpack.c.b16 %v1287, %v1286
    %v1307 = vpack.c.b16 %v1289, %v1288
    %v1308 = vpack.c.b16 %v1291, %v1290
    %v1309 = vpack.c.b16 %v1293, %v1292
    %1326 = vmatprep.subr.bf16.mxu0 0
    %1327 = vmatpush1.bf16.msra.mxu0 %v1294
    %1328 = vmatprep.subr.bf16.mxu0 0
    %1329 = vmatpush1.bf16.msra.mxu0 %v1295
    %1330 = vmatprep.subr.bf16.mxu0 0
    %1331 = vmatpush1.bf16.msra.mxu0 %v1296
    %1332 = vmatprep.subr.bf16.mxu0 0
    %1333 = vmatpush1.bf16.msra.mxu0 %v1297
    %1334 = vmatprep.subr.bf16.mxu0 0
    %1335 = vmatpush1.bf16.msra.mxu0 %v1298
    %1336 = vmatprep.subr.bf16.mxu0 0
    %1337 = vmatpush1.bf16.msra.mxu0 %v1299
    %1338 = vmatprep.subr.bf16.mxu0 0
    %1339 = vmatpush1.bf16.msra.mxu0 %v1300
    %1340 = vmatprep.subr.bf16.mxu0 0
    %1341 = vmatpush1.bf16.msra.mxu0 %v1301
    %1342 = vmatprep.subr.bf16.mxu0 0
    %1343 = vmatpush1.bf16.msra.mxu0 %v1302
    %1344 = vmatprep.subr.bf16.mxu0 0
    %1345 = vmatpush1.bf16.msra.mxu0 %v1303
    %1346 = vmatprep.subr.bf16.mxu0 0
    %1347 = vmatpush1.bf16.msra.mxu0 %v1304
    %1348 = vmatprep.subr.bf16.mxu0 0
    %1349 = vmatpush1.bf16.msra.mxu0 %v1305
    %1350 = vmatprep.subr.bf16.mxu0 0
    %1351 = vmatpush1.bf16.msra.mxu0 %v1306
    %1352 = vmatprep.subr.bf16.mxu0 0
    %1353 = vmatpush1.bf16.msra.mxu0 %v1307
    %1354 = vmatprep.subr.bf16.mxu0 0
    %1355 = vmatpush1.bf16.msra.mxu0 %v1308
    %1356 = vmatprep.subr.bf16.mxu0 0
    %1357 = vmatpush1.bf16.msra.mxu0 %v1309
    %1358 = vmatprep.mubr.bf16.mxu0 %v1190
    %1359 = vmatmul.mubr.bf16.gmra.mrb[0].mxu0 %v1189
    %v1360 = vpop.f32.mrb[0].mxu0
    %v1361 = vadd.f32 %v1228, %v1360
    %v1362 = vpop.f32.mrb[0].mxu0
    %v1363 = vpop.f32.mrb[0].mxu0
    %v1364 = vpop.f32.mrb[0].mxu0
    %1365 = vdwg.mxu0
    %1366 = vst [vmem:[#allocation11] sm:$0xff] %v1361
    // Predicated region
    $region58: #{tpu_custom_call.1} parent=1 // pred_check
      _
    $region59: #{tpu_custom_call.1} parent=1 // pred_check_branch
      %1368 = sbr.rel (0) target = $region61
    $region60: #{tpu_custom_call.1} parent=1 // pred_region
      %s1370 = ssub.s32 128, 128
      %1371 = vsyncadd [#allocation4], %s1370
      %s1373 = sshll.u32 [#allocation11], 4
      %s1374 = int_to_ptr.vmem [resolvable:$true] %s1373
      %1376 = dma.vmem_to_hbm [thread:$0]  %s1374, 128, %s9, [#allocation4]
    $region61: #{tpu_custom_call.1} parent=1 // pred_fallthru
      _
    // Predicated region
    $region62: #{tpu_custom_call.1} parent=1 // pred_check
      _
    $region63: #{tpu_custom_call.1} parent=1 // pred_check_branch
      %1378 = sbr.rel (0) target = $region65
    $region64: #{tpu_custom_call.1} parent=1 // pred_region
      %1379 = dma.done [#allocation4], 128
    $region65: #{tpu_custom_call.1} parent=1 // pred_fallthru
      _
    %1380 = vsyncpa [#allocation3], 1
    %1381 = vsyncpa [#allocation6], 1
    %1382 = vsyncpa [#allocation9], 1
    %1383 = vsyncpa [#allocation4], 1

</llo_original>
